<compile_context>
chip_gen: v7x
topology: tpu7x:2x2x1
jax: 0.10.0
libtpu: 0.0.40
codegen_flags: <defaults>
</compile_context>

<pallas_src>
import jax
import jax.numpy as jnp
from jax import lax
from jax.experimental import pallas as pl
from jax.experimental.pallas import tpu as pltpu

# --- scaled-down CANINE config (real canine-c: HIDDEN=768, NUM_BUCKETS=16384,
#     MAX_POS=16384); semantics identical, shapes kept small for the demo ---
HIDDEN = 64
NUM_HASH = 8
SHARD = HIDDEN // NUM_HASH
NUM_BUCKETS = 128              # power of two -> modulo becomes a bitmask
TYPE_VOCAB = 16
MAX_POS = 128
EPS = 1e-12
PRIMES = [31, 43, 59, 61, 73, 97, 103, 113]  # transformers CanineEmbeddings._PRIMES

B, S = 2, 16                   # batch, sequence (start-token + 14 chars + end-token)
TILE_TOKENS = 16               # token rows per grid step (multiple of S and of 8);
                               # raise to 256+ for real workloads on v6e/v7x
assert TILE_TOKENS % S == 0 and (B * S) % TILE_TOKENS == 0


def canine_embed_kernel(ids_ref, tbl_ref, pos_ref, gamma_ref, beta_ref, out_ref):
    # ids_ref: [T, 1] int32; tbl_ref: [K*NB, H] bf16 block-diagonal table;
    # pos_ref: [T, H] f32 (position + token-type, pre-tiled on the wrapper).
    ids1 = ids_ref[...] + 1                                      # hoisted out of k-loop
    iota = lax.broadcasted_iota(jnp.int32, (TILE_TOKENS, NUM_BUCKETS), 1)

    # Per-hash one-hot over NUM_BUCKETS lanes; concatenated along lanes they
    # form the multi-hot selector for the block-diagonal table.
    parts = []
    for prime in PRIMES:
        hashed = (ids1 * prime) & (NUM_BUCKETS - 1)              # [T, 1] int32
        parts.append(iota == hashed)                             # [T, NB] bool
    multihot = jnp.concatenate(parts, axis=1).astype(jnp.bfloat16)  # exact in bf16

    # One fused MXU dot -> full-HIDDEN result in registers, f32 accumulation.
    embeds = jnp.dot(multihot, tbl_ref[...],
                     preferred_element_type=jnp.float32)          # [T, H] f32

    # + (char_position_embeddings + token_type_embeddings[0]), folded upstream.
    embeds = embeds + pos_ref[...]

    # LayerNorm over hidden dim (biased variance, eps=1e-12), f32.
    mean = jnp.mean(embeds, axis=-1, keepdims=True)
    xc = embeds - mean
    var = jnp.mean(xc * xc, axis=-1, keepdims=True)
    out = xc * lax.rsqrt(var + EPS) * gamma_ref[...] + beta_ref[...]
    # Dropout is identity at inference. Single lane-dense store.
    out_ref[...] = out


def canine_embeddings(ids, hash_tables, pos_table, tt_table, gamma, beta):
    """Pallas wrapper.

    ids:          [B, S]  int32 codepoints (+ start/end tokens)
    hash_tables:  [NUM_HASH, NUM_BUCKETS, SHARD]  f32
    pos_table:    [MAX_POS, HIDDEN] f32
    tt_table:     [TYPE_VOCAB, HIDDEN] f32
    gamma, beta:  [1, HIDDEN] f32
    """
    b, s = ids.shape
    bs = b * s
    assert bs % TILE_TOKENS == 0 and TILE_TOKENS % s == 0

    ids_flat = ids.reshape(bs, 1).astype(jnp.int32)

    # Block-diagonal lane-dense table [K*NB, HIDDEN]: rows k*NB..(k+1)*NB-1 hold
    # hash table k in columns k*SHARD..(k+1)*SHARD-1. bf16 MXU operand.
    # TODO(synk): do NOT materialize this at canine-c scale; use HBM gather.
    blockdiag = jnp.zeros((NUM_HASH * NUM_BUCKETS, HIDDEN), jnp.float32)
    for k in range(NUM_HASH):
        blockdiag = blockdiag.at[
            k * NUM_BUCKETS:(k + 1) * NUM_BUCKETS,
            k * SHARD:(k + 1) * SHARD].set(hash_tables[k])
    blockdiag = blockdiag.astype(jnp.bfloat16)

    # Fold token-type row 0 into the position slice and pre-tile to the tile
    # height (tiles cover whole sequences, so positions simply repeat).
    pos_tt = pos_table[:s] + tt_table[0][None, :]                # [S, H]
    pos_tt_tiled = jnp.tile(pos_tt, (TILE_TOKENS // s, 1))       # [T, H]

    n_tiles = bs // TILE_TOKENS                                  # >= 2: both v7x TCs busy
    out = pl.pallas_call(
        canine_embed_kernel,
        out_shape=jax.ShapeDtypeStruct((bs, HIDDEN), jnp.float32),
        grid_spec=pltpu.PrefetchScalarGridSpec(
            num_scalar_prefetch=0,
            grid=(n_tiles,),
            in_specs=[
                pl.BlockSpec((TILE_TOKENS, 1), lambda i: (i, 0)),
                pl.BlockSpec((NUM_HASH * NUM_BUCKETS, HIDDEN), lambda i: (0, 0)),
                pl.BlockSpec((TILE_TOKENS, HIDDEN), lambda i: (0, 0)),
                pl.BlockSpec((1, HIDDEN), lambda i: (0, 0)),
                pl.BlockSpec((1, HIDDEN), lambda i: (0, 0)),
            ],
            # HIDDEN=64 demo accepts the sub-128-lane store; real HIDDEN=768 is
            # a multiple of 128 and stores unmasked.
            out_specs=pl.BlockSpec((TILE_TOKENS, HIDDEN), lambda i: (i, 0)),
        ),
        compiler_params=pltpu.CompilerParams(
            dimension_semantics=("parallel",)),
    )(ids_flat, blockdiag, pos_tt_tiled, gamma, beta)
    return out.reshape(b, s, HIDDEN)


def reference(ids, hash_tables, pos_table, tt_table, gamma, beta):
    """Pure-JAX gather-based reference mirroring the PyTorch forward.

    Uses the same bf16-rounded hash tables as the kernel (selection is exact),
    so the comparison is tight.
    """
    b, s = ids.shape
    tbl = hash_tables.astype(jnp.bfloat16).astype(jnp.float32)
    shards = []
    for k, prime in enumerate(PRIMES):
        hashed = ((ids + 1) * prime) % NUM_BUCKETS
        shards.append(jnp.take(tbl[k], hashed, axis=0))
    e = jnp.concatenate(shards, axis=-1)
    e = e + tt_table[0][None, None, :]
    e = e + pos_table[:s][None, :, :]
    mean = e.mean(-1, keepdims=True)
    var = ((e - mean) ** 2).mean(-1, keepdims=True)
    return (e - mean) / jnp.sqrt(var + EPS) * gamma[0] + beta[0]


if __name__ == "__main__":
    key = jax.random.PRNGKey(0)
    k_tbl, k_pos, k_tt, k_ids = jax.random.split(key, 4)

    # Deterministic synthetic parameters (shapes from CanineEmbeddings.__init__)
    shard_keys = jax.random.split(k_tbl, NUM_HASH)
    hash_tables = jnp.stack([
        0.02 * jax.random.normal(shard_keys[k], (NUM_BUCKETS, SHARD), jnp.float32)
        for k in range(NUM_HASH)])                      # [K, NUM_BUCKETS, SHARD]

    pos_table = 0.02 * jax.random.normal(k_pos, (MAX_POS, HIDDEN), jnp.float32)
    tt_table = 0.02 * jax.random.normal(k_tt, (TYPE_VOCAB, HIDDEN), jnp.float32)
    gamma = jnp.ones((1, HIDDEN), jnp.float32)
    beta = jnp.zeros((1, HIDDEN), jnp.float32)

    # Input tokens: [start_tok=57344, codepoints..., end_tok=57345] per row,
    # matching tokenize(text, end_tokens=(57344, 57345)).
    chars = jax.random.randint(k_ids, (B, S - 2), 32, 127, jnp.int32)
    ids = jnp.concatenate(
        [jnp.full((B, 1), 57344, jnp.int32), chars,
         jnp.full((B, 1), 57345, jnp.int32)], axis=1)

    out = canine_embeddings(ids, hash_tables, pos_table, tt_table, gamma, beta)
    out = jax.block_until_ready(out)

    ref = reference(ids, hash_tables, pos_table, tt_table, gamma, beta)
    assert out.shape == (B, S, HIDDEN)
    assert jnp.allclose(out, ref, atol=1e-5, rtol=1e-5), "mismatch vs reference"

    # TODO(synk): tokenize()/pad() are host-side string preprocessing, not part
    # of the tensor forward pass; they stay in plain Python.
    print("KERNEL_OK")
</pallas_src>

<mosaic_0001>
module attributes {stable_mosaic.version = 11 : i64} {
  func.func @canine_embed_kernel(%arg0: i32, %arg1: memref<16x1xi32, #tpu.memory_space<vmem>>, %arg2: memref<1024x64xbf16, #tpu.memory_space<vmem>>, %arg3: memref<16x64xf32, #tpu.memory_space<vmem>>, %arg4: memref<1x64xf32, #tpu.memory_space<vmem>>, %arg5: memref<1x64xf32, #tpu.memory_space<vmem>>, %arg6: memref<16x64xf32, #tpu.memory_space<vmem>>) attributes {dimension_semantics = [#tpu.dimension_semantics<parallel>], iteration_bounds = array<i64: 2>, scalar_prefetch = 0 : i64, scratch_operands = 0 : i64, tpu.core_type = #tpu.core_type<tc>, window_params = [{transform_indices = @transform_0, window_bounds = array<i64: 16, 1>}, {pipeline_mode = #tpu.pipeline_mode<synchronous>, transform_indices = @transform_1, window_bounds = array<i64: 1024, 64>}, {pipeline_mode = #tpu.pipeline_mode<synchronous>, transform_indices = @transform_2, window_bounds = array<i64: 16, 64>}, {pipeline_mode = #tpu.pipeline_mode<synchronous>, transform_indices = @transform_3, window_bounds = array<i64: 1, 64>}, {pipeline_mode = #tpu.pipeline_mode<synchronous>, transform_indices = @transform_4, window_bounds = array<i64: 1, 64>}, {transform_indices = @transform_5, window_bounds = array<i64: 16, 64>}]} {
    %c0 = arith.constant 0 : index
    %c0_0 = arith.constant 0 : index
    %0 = vector.load %arg1[%c0, %c0_0] : memref<16x1xi32, #tpu.memory_space<vmem>>, vector<16x1xi32>
    %c1_i32 = arith.constant 1 : i32
    %1 = vector.broadcast %c1_i32 : i32 to vector<16x1xi32>
    %2 = arith.addi %0, %1 : vector<16x1xi32>
    %3 = tpu.iota {dimensions = array<i32: 1>} : vector<16x128xi32>
    %c31_i32 = arith.constant 31 : i32
    %4 = vector.broadcast %c31_i32 : i32 to vector<16x1xi32>
    %5 = arith.muli %2, %4 : vector<16x1xi32>
    %c127_i32 = arith.constant 127 : i32
    %6 = vector.broadcast %c127_i32 : i32 to vector<16x1xi32>
    %7 = arith.andi %5, %6 : vector<16x1xi32>
    %8 = vector.broadcast %7 : vector<16x1xi32> to vector<16x128xi32>
    %9 = arith.cmpi eq, %3, %8 : vector<16x128xi32>
    %c43_i32 = arith.constant 43 : i32
    %10 = vector.broadcast %c43_i32 : i32 to vector<16x1xi32>
    %11 = arith.muli %2, %10 : vector<16x1xi32>
    %c127_i32_1 = arith.constant 127 : i32
    %12 = vector.broadcast %c127_i32_1 : i32 to vector<16x1xi32>
    %13 = arith.andi %11, %12 : vector<16x1xi32>
    %14 = vector.broadcast %13 : vector<16x1xi32> to vector<16x128xi32>
    %15 = arith.cmpi eq, %3, %14 : vector<16x128xi32>
    %c59_i32 = arith.constant 59 : i32
    %16 = vector.broadcast %c59_i32 : i32 to vector<16x1xi32>
    %17 = arith.muli %2, %16 : vector<16x1xi32>
    %c127_i32_2 = arith.constant 127 : i32
    %18 = vector.broadcast %c127_i32_2 : i32 to vector<16x1xi32>
    %19 = arith.andi %17, %18 : vector<16x1xi32>
    %20 = vector.broadcast %19 : vector<16x1xi32> to vector<16x128xi32>
    %21 = arith.cmpi eq, %3, %20 : vector<16x128xi32>
    %c61_i32 = arith.constant 61 : i32
    %22 = vector.broadcast %c61_i32 : i32 to vector<16x1xi32>
    %23 = arith.muli %2, %22 : vector<16x1xi32>
    %c127_i32_3 = arith.constant 127 : i32
    %24 = vector.broadcast %c127_i32_3 : i32 to vector<16x1xi32>
    %25 = arith.andi %23, %24 : vector<16x1xi32>
    %26 = vector.broadcast %25 : vector<16x1xi32> to vector<16x128xi32>
    %27 = arith.cmpi eq, %3, %26 : vector<16x128xi32>
    %c73_i32 = arith.constant 73 : i32
    %28 = vector.broadcast %c73_i32 : i32 to vector<16x1xi32>
    %29 = arith.muli %2, %28 : vector<16x1xi32>
    %c127_i32_4 = arith.constant 127 : i32
    %30 = vector.broadcast %c127_i32_4 : i32 to vector<16x1xi32>
    %31 = arith.andi %29, %30 : vector<16x1xi32>
    %32 = vector.broadcast %31 : vector<16x1xi32> to vector<16x128xi32>
    %33 = arith.cmpi eq, %3, %32 : vector<16x128xi32>
    %c97_i32 = arith.constant 97 : i32
    %34 = vector.broadcast %c97_i32 : i32 to vector<16x1xi32>
    %35 = arith.muli %2, %34 : vector<16x1xi32>
    %c127_i32_5 = arith.constant 127 : i32
    %36 = vector.broadcast %c127_i32_5 : i32 to vector<16x1xi32>
    %37 = arith.andi %35, %36 : vector<16x1xi32>
    %38 = vector.broadcast %37 : vector<16x1xi32> to vector<16x128xi32>
    %39 = arith.cmpi eq, %3, %38 : vector<16x128xi32>
    %c103_i32 = arith.constant 103 : i32
    %40 = vector.broadcast %c103_i32 : i32 to vector<16x1xi32>
    %41 = arith.muli %2, %40 : vector<16x1xi32>
    %c127_i32_6 = arith.constant 127 : i32
    %42 = vector.broadcast %c127_i32_6 : i32 to vector<16x1xi32>
    %43 = arith.andi %41, %42 : vector<16x1xi32>
    %44 = vector.broadcast %43 : vector<16x1xi32> to vector<16x128xi32>
    %45 = arith.cmpi eq, %3, %44 : vector<16x128xi32>
    %c113_i32 = arith.constant 113 : i32
    %46 = vector.broadcast %c113_i32 : i32 to vector<16x1xi32>
    %47 = arith.muli %2, %46 : vector<16x1xi32>
    %c127_i32_7 = arith.constant 127 : i32
    %48 = vector.broadcast %c127_i32_7 : i32 to vector<16x1xi32>
    %49 = arith.andi %47, %48 : vector<16x1xi32>
    %50 = vector.broadcast %49 : vector<16x1xi32> to vector<16x128xi32>
    %51 = arith.cmpi eq, %3, %50 : vector<16x128xi32>
    %52 = tpu.concatenate %9, %15, %21, %27, %33, %39, %45, %51 in 1 : vector<16x128xi1>, vector<16x128xi1>, vector<16x128xi1>, vector<16x128xi1>, vector<16x128xi1>, vector<16x128xi1>, vector<16x128xi1>, vector<16x128xi1> -> vector<16x1024xi1>
    %53 = arith.extui %52 : vector<16x1024xi1> to vector<16x1024xi32>
    %54 = arith.sitofp %53 : vector<16x1024xi32> to vector<16x1024xf32>
    %55 = arith.truncf %54 : vector<16x1024xf32> to vector<16x1024xbf16>
    %c0_8 = arith.constant 0 : index
    %c0_9 = arith.constant 0 : index
    %56 = vector.load %arg2[%c0_8, %c0_9] : memref<1024x64xbf16, #tpu.memory_space<vmem>>, vector<1024x64xbf16>
    %cst = arith.constant dense<0.000000e+00> : vector<16x64xf32>
    %57 = tpu.matmul %55, %56, %cst {dimension_numbers = #tpu.dot_dimension_numbers<[1], [0], [0], [1], [0, 0, 1, 1], [], []>} : vector<16x1024xbf16>, vector<1024x64xbf16>, vector<16x64xf32> -> vector<16x64xf32>
    %c0_10 = arith.constant 0 : index
    %c0_11 = arith.constant 0 : index
    %58 = vector.load %arg3[%c0_10, %c0_11] : memref<16x64xf32, #tpu.memory_space<vmem>>, vector<16x64xf32>
    %59 = arith.addf %57, %58 : vector<16x64xf32>
    %cst_12 = arith.constant dense<0.000000e+00> : vector<16xf32>
    %60 = vector.multi_reduction <add>, %59, %cst_12 [1] : vector<16x64xf32> to vector<16xf32>
    %61 = vector.shape_cast %60 : vector<16xf32> to vector<16x1xf32>
    %cst_13 = arith.constant 6.400000e+01 : f32
    %62 = vector.broadcast %cst_13 : f32 to vector<16x1xf32>
    %63 = arith.divf %61, %62 : vector<16x1xf32>
    %64 = vector.broadcast %63 : vector<16x1xf32> to vector<16x64xf32>
    %65 = arith.subf %59, %64 : vector<16x64xf32>
    %66 = arith.mulf %65, %65 : vector<16x64xf32>
    %cst_14 = arith.constant dense<0.000000e+00> : vector<16xf32>
    %67 = vector.multi_reduction <add>, %66, %cst_14 [1] : vector<16x64xf32> to vector<16xf32>
    %68 = vector.shape_cast %67 : vector<16xf32> to vector<16x1xf32>
    %cst_15 = arith.constant 6.400000e+01 : f32
    %69 = vector.broadcast %cst_15 : f32 to vector<16x1xf32>
    %70 = arith.divf %68, %69 : vector<16x1xf32>
    %cst_16 = arith.constant 9.99999996E-13 : f32
    %71 = vector.broadcast %cst_16 : f32 to vector<16x1xf32>
    %72 = arith.addf %70, %71 : vector<16x1xf32>
    %73 = math.rsqrt %72 : vector<16x1xf32>
    %74 = vector.broadcast %73 : vector<16x1xf32> to vector<16x64xf32>
    %75 = arith.mulf %65, %74 : vector<16x64xf32>
    %c0_17 = arith.constant 0 : index
    %c0_18 = arith.constant 0 : index
    %76 = vector.load %arg4[%c0_17, %c0_18] : memref<1x64xf32, #tpu.memory_space<vmem>>, vector<1x64xf32>
    %77 = vector.broadcast %76 : vector<1x64xf32> to vector<16x64xf32>
    %78 = arith.mulf %75, %77 : vector<16x64xf32>
    %c0_19 = arith.constant 0 : index
    %c0_20 = arith.constant 0 : index
    %79 = vector.load %arg5[%c0_19, %c0_20] : memref<1x64xf32, #tpu.memory_space<vmem>>, vector<1x64xf32>
    %80 = vector.broadcast %79 : vector<1x64xf32> to vector<16x64xf32>
    %81 = arith.addf %78, %80 : vector<16x64xf32>
    %c0_21 = arith.constant 0 : index
    %c0_22 = arith.constant 0 : index
    %82 = vector.load %arg6[%c0_21, %c0_22] : memref<16x64xf32, #tpu.memory_space<vmem>>, vector<16x64xf32>
    tpu.vector_store %arg6[%c0_21, %c0_22], %81 {strides = array<i32>} : memref<16x64xf32, #tpu.memory_space<vmem>>, vector<16x64xf32>,
    return
  }
  func.func @transform_0(%arg0: i32) -> (i32, i32) {
    %c0_i32 = arith.constant 0 : i32
    %c0_i32_0 = arith.constant 0 : i32
    return %arg0, %c0_i32 : i32, i32
  }
  func.func @transform_1(%arg0: i32) -> (i32, i32) {
    %c0_i32 = arith.constant 0 : i32
    %c0_i32_0 = arith.constant 0 : i32
    %c0_i32_1 = arith.constant 0 : i32
    return %c0_i32, %c0_i32_0 : i32, i32
  }
  func.func @transform_2(%arg0: i32) -> (i32, i32) {
    %c0_i32 = arith.constant 0 : i32
    %c0_i32_0 = arith.constant 0 : i32
    %c0_i32_1 = arith.constant 0 : i32
    return %c0_i32, %c0_i32_0 : i32, i32
  }
  func.func @transform_3(%arg0: i32) -> (i32, i32) {
    %c0_i32 = arith.constant 0 : i32
    %c0_i32_0 = arith.constant 0 : i32
    %c0_i32_1 = arith.constant 0 : i32
    return %c0_i32, %c0_i32_0 : i32, i32
  }
  func.func @transform_4(%arg0: i32) -> (i32, i32) {
    %c0_i32 = arith.constant 0 : i32
    %c0_i32_0 = arith.constant 0 : i32
    %c0_i32_1 = arith.constant 0 : i32
    return %c0_i32, %c0_i32_0 : i32, i32
  }
  func.func @transform_5(%arg0: i32) -> (i32, i32) {
    %c0_i32 = arith.constant 0 : i32
    %c0_i32_0 = arith.constant 0 : i32
    return %arg0, %c0_i32 : i32, i32
  }
}

</mosaic_0001>

<llo_original>
// kernel: tpu_custom_call.1
$region0: #{tpu_custom_call.1}
  #allocation0 [shape = 'u32[]', space=smem, size = 0x4, offset = 0x4, fixed_abs, tag = 'smem constant byte address 0x4 - core index']
  #allocation1 [shape = 'u32[144,128]{1,0:T(1,128)}', space=vmem, size = 0x12000, scoped, tag = 'internal scratch']
  %s0 = inlined_call_operand.vmem [shape: s32[32,1], index: 0, kind: input, shape index: {}]
  %s1 = inlined_call_operand.vmem [shape: bf16[1024,64], index: 1, kind: input, shape index: {}]
  %s2 = inlined_call_operand.vmem [shape: f32[16,64], index: 2, kind: input, shape index: {}]
  %s3 = inlined_call_operand.vmem [shape: f32[1,64], index: 3, kind: input, shape index: {}]
  %s4 = inlined_call_operand.vmem [shape: f32[1,64], index: 4, kind: input, shape index: {}]
  %s5 = inlined_call_operand.hbm [shape: f32[32,64], index: 5, kind: output, shape index: {}]
  %s6 = sld [smem:[#allocation0]]
  $region53: #{tpu_custom_call.1} parent=0
    _
  %s8 = ssub.s32 1, %s6
  %s9 = scalar_select 0, %s8, %s6
  $region1: #{tpu_custom_call.1} parent=0
    #allocation2 [shape = 'u8[16384]{0}', space=vmem, size = 0x4000, scoped, tag = 'output window, operand 0']
    #allocation3 [shape = 's32[2]{0}', space=sflag, size = 0x8, scoped, tag = 'scoped memory for tpu_custom_call.1']
    %10 = vsyncpa [#allocation3], 0
    %s11 = scalar_lea.sflag [#allocation3], 1
    %12 = vsyncpa %s11, 0
    loop: start=0, step=1, limit=4
    $region2: #{tpu_custom_call.1} parent=1 // loop_pre_header
      _
    $region3: #{tpu_custom_call.1} parent=1 // loop_header
      %s14 = sphi 0, %s18
      %p15 = scmp.ge.s32.totalorder %s14, 4
      %s24 = sphi 0, %s26
      %s27 = sphi 0, %s24
      %s28 = sphi 0, %s27
      %s44 = sphi 0, %s28
      %s48 = sphi 0, %s48
      %s50 = sphi 0, %s48
      %s51 = sphi 0, %s50
      %s65 = sphi 0, %s51
      %s69 = sphi 0, %s69
      %s71 = sphi 0, %s69
      %s72 = sphi 0, %s71
      %s86 = sphi 0, %s72
      %s90 = sphi 0, %s90
      %s92 = sphi 0, %s90
      %s93 = sphi 0, %s92
      %s107 = sphi 0, %s93
      %s111 = sphi 0, %s111
      %s113 = sphi 0, %s111
      %s114 = sphi 0, %s113
      %s128 = sphi 0, %s114
      %s134 = sphi 0, %s136
      %s137 = sphi 0, %s134
      %s138 = sphi 0, %s137
      %s154 = sphi 0, %s138
    $region4: #{tpu_custom_call.1} parent=1 // loop_header_branch
      %17 = sbr.rel (%p15) target = $region8
    $region5: #{tpu_custom_call.1} parent=1 // loop_body
      %s19 = ssub.s32 %s14, 1
      %s20 = ssub.s32 %s14, 2
      %s21 = sadd.s32 %s14, 1
      %s22 = ssub.s32 %s14, %s21
      %p23 = scmp.eq.s32.totalorder %s22, 0
      %s25 = sadd.s32 %s24, 1
      %s26 = scalar_select %p23, %s24, %s25
      %p29 = pneg %p23
      %p30 = scmp.eq.s32.totalorder %s14, 1
      %p31 = por %p29, %p30
      %p32 = scmp.ne.s32.totalorder %s24, %s27
      %p33 = scmp.eq.s32.totalorder %s14, 0
      %p34 = por %p32, %p33
      %p35 = scmp.ne.s32.totalorder %s24, %s27
      %p36 = scmp.eq.s32.totalorder %s19, 1
      %p37 = por %p35, %p36
      %p38 = scmp.ne.s32.totalorder %s27, %s28
      %p39 = scmp.eq.s32.totalorder %s19, 0
      %p40 = por %p38, %p39
      %p41 = scmp.ne.s32.totalorder %s27, %s28
      %p42 = scmp.eq.s32.totalorder %s20, 1
      %p43 = por %p41, %p42
      %p45 = scmp.ne.s32.totalorder %s28, %s44
      %p46 = scmp.eq.s32.totalorder %s20, 0
      %p47 = por %p45, %p46
      %s49 = sadd.s32 %s48, 1
      %p52 = scmp.eq.s32.totalorder %s14, 1
      %p53 = scmp.ne.s32.totalorder %s48, %s50
      %p54 = scmp.eq.s32.totalorder %s14, 0
      %p55 = por %p53, %p54
      %p56 = scmp.ne.s32.totalorder %s48, %s50
      %p57 = scmp.eq.s32.totalorder %s19, 1
      %p58 = por %p56, %p57
      %p59 = scmp.ne.s32.totalorder %s50, %s51
      %p60 = scmp.eq.s32.totalorder %s19, 0
      %p61 = por %p59, %p60
      %p62 = scmp.ne.s32.totalorder %s50, %s51
      %p63 = scmp.eq.s32.totalorder %s20, 1
      %p64 = por %p62, %p63
      %p66 = scmp.ne.s32.totalorder %s51, %s65
      %p67 = scmp.eq.s32.totalorder %s20, 0
      %p68 = por %p66, %p67
      %s70 = sadd.s32 %s69, 1
      %p73 = scmp.eq.s32.totalorder %s14, 1
      %p74 = scmp.ne.s32.totalorder %s69, %s71
      %p75 = scmp.eq.s32.totalorder %s14, 0
      %p76 = por %p74, %p75
      %p77 = scmp.ne.s32.totalorder %s69, %s71
      %p78 = scmp.eq.s32.totalorder %s19, 1
      %p79 = por %p77, %p78
      %p80 = scmp.ne.s32.totalorder %s71, %s72
      %p81 = scmp.eq.s32.totalorder %s19, 0
      %p82 = por %p80, %p81
      %p83 = scmp.ne.s32.totalorder %s71, %s72
      %p84 = scmp.eq.s32.totalorder %s20, 1
      %p85 = por %p83, %p84
      %p87 = scmp.ne.s32.totalorder %s72, %s86
      %p88 = scmp.eq.s32.totalorder %s20, 0
      %p89 = por %p87, %p88
      %s91 = sadd.s32 %s90, 1
      %p94 = scmp.eq.s32.totalorder %s14, 1
      %p95 = scmp.ne.s32.totalorder %s90, %s92
      %p96 = scmp.eq.s32.totalorder %s14, 0
      %p97 = por %p95, %p96
      %p98 = scmp.ne.s32.totalorder %s90, %s92
      %p99 = scmp.eq.s32.totalorder %s19, 1
      %p100 = por %p98, %p99
      %p101 = scmp.ne.s32.totalorder %s92, %s93
      %p102 = scmp.eq.s32.totalorder %s19, 0
      %p103 = por %p101, %p102
      %p104 = scmp.ne.s32.totalorder %s92, %s93
      %p105 = scmp.eq.s32.totalorder %s20, 1
      %p106 = por %p104, %p105
      %p108 = scmp.ne.s32.totalorder %s93, %s107
      %p109 = scmp.eq.s32.totalorder %s20, 0
      %p110 = por %p108, %p109
      %s112 = sadd.s32 %s111, 1
      %p115 = scmp.eq.s32.totalorder %s14, 1
      %p116 = scmp.ne.s32.totalorder %s111, %s113
      %p117 = scmp.eq.s32.totalorder %s14, 0
      %p118 = por %p116, %p117
      %p119 = scmp.ne.s32.totalorder %s111, %s113
      %p120 = scmp.eq.s32.totalorder %s19, 1
      %p121 = por %p119, %p120
      %p122 = scmp.ne.s32.totalorder %s113, %s114
      %p123 = scmp.eq.s32.totalorder %s19, 0
      %p124 = por %p122, %p123
      %p125 = scmp.ne.s32.totalorder %s113, %s114
      %p126 = scmp.eq.s32.totalorder %s20, 1
      %p127 = por %p125, %p126
      %p129 = scmp.ne.s32.totalorder %s114, %s128
      %p130 = scmp.eq.s32.totalorder %s20, 0
      %p131 = por %p129, %p130
      %s132 = ssub.s32 %s14, %s21
      %p133 = scmp.eq.s32.totalorder %s132, 0
      %s135 = sadd.s32 %s134, 1
      %s136 = scalar_select %p133, %s134, %s135
      %p139 = pneg %p133
      %p140 = scmp.eq.s32.totalorder %s14, 1
      %p141 = por %p139, %p140
      %p142 = scmp.ne.s32.totalorder %s134, %s137
      %p143 = scmp.eq.s32.totalorder %s14, 0
      %p144 = por %p142, %p143
      %p145 = scmp.ne.s32.totalorder %s134, %s137
      %p146 = scmp.eq.s32.totalorder %s19, 1
      %p147 = por %p145, %p146
      %p148 = scmp.ne.s32.totalorder %s137, %s138
      %p149 = scmp.eq.s32.totalorder %s19, 0
      %p150 = por %p148, %p149
      %p151 = scmp.ne.s32.totalorder %s137, %s138
      %p152 = scmp.eq.s32.totalorder %s20, 1
      %p153 = por %p151, %p152
      %p155 = scmp.ne.s32.totalorder %s138, %s154
      %p156 = scmp.eq.s32.totalorder %s20, 0
      %p157 = por %p155, %p156
      %p158 = scmp.le.s32.totalorder 1, %s14
      %p159 = scmp.lt.s32.totalorder %s14, 3
      %p160 = pnand %p158, %p159
      %p161 = pneg %p160
      // Predicated region
      $region9: #{tpu_custom_call.1} parent=5 // pred_check
        _
      $region10: #{tpu_custom_call.1} parent=5 // pred_check_branch
        %163 = sbr.rel (%p160) target = $region12
      $region11: #{tpu_custom_call.1} parent=5 // pred_region
        %s164 = ssub.s32 %s14, 1
        // Predicated region
        $region13: #{tpu_custom_call.1} parent=11 // pred_check
          %p165 = pneg %p61
        $region14: #{tpu_custom_call.1} parent=11 // pred_check_branch
          %167 = sbr.rel (%p165) target = $region16
        $region15: #{tpu_custom_call.1} parent=11 // pred_region
          _
        $region16: #{tpu_custom_call.1} parent=11 // pred_fallthru
          _
        // Predicated region
        $region17: #{tpu_custom_call.1} parent=11 // pred_check
          %p168 = pneg %p82
        $region18: #{tpu_custom_call.1} parent=11 // pred_check_branch
          %170 = sbr.rel (%p168) target = $region20
        $region19: #{tpu_custom_call.1} parent=11 // pred_region
          _
        $region20: #{tpu_custom_call.1} parent=11 // pred_fallthru
          _
        // Predicated region
        $region21: #{tpu_custom_call.1} parent=11 // pred_check
          %p171 = pneg %p103
        $region22: #{tpu_custom_call.1} parent=11 // pred_check_branch
          %173 = sbr.rel (%p171) target = $region24
        $region23: #{tpu_custom_call.1} parent=11 // pred_region
          _
        $region24: #{tpu_custom_call.1} parent=11 // pred_fallthru
          _
        // Predicated region
        $region25: #{tpu_custom_call.1} parent=11 // pred_check
          %p174 = pneg %p124
        $region26: #{tpu_custom_call.1} parent=11 // pred_check_branch
          %176 = sbr.rel (%p174) target = $region28
        $region27: #{tpu_custom_call.1} parent=11 // pred_region
          _
        $region28: #{tpu_custom_call.1} parent=11 // pred_fallthru
          _
      $region12: #{tpu_custom_call.1} parent=5 // pred_fallthru
        _
      %p177 = scmp.lt.s32.totalorder %s14, 2
      // Predicated region
      $region29: #{tpu_custom_call.1} parent=5 // pred_check
        %p178 = pneg %p177
      $region30: #{tpu_custom_call.1} parent=5 // pred_check_branch
        %180 = sbr.rel (%p178) target = $region32
      $region31: #{tpu_custom_call.1} parent=5 // pred_region
        // Predicated region
        $region33: #{tpu_custom_call.1} parent=31 // pred_check
          %p181 = pneg %p34
        $region34: #{tpu_custom_call.1} parent=31 // pred_check_branch
          %183 = sbr.rel (%p181) target = $region36
        $region35: #{tpu_custom_call.1} parent=31 // pred_region
          %s184 = smul.u32 2, %s14
          %p185 = scmp.lt.s32.totalorder %s184, 3
          %s186 = scalar_select %p185, %s184, 3
          %s187 = smul.addr %s186, 8
          %s188 = scalar_lea.vmem %s0, %s187
          %s189 = smul.u32 2, %s14
        $region36: #{tpu_custom_call.1} parent=31 // pred_fallthru
          _
      $region32: #{tpu_custom_call.1} parent=5 // pred_fallthru
        _
      %p190 = scmp.le.s32.totalorder 1, %s14
      %p191 = scmp.lt.s32.totalorder %s14, 3
      %p192 = pnand %p190, %p191
      %p193 = pneg %p192
      // Predicated region
      $region37: #{tpu_custom_call.1} parent=5 // pred_check
        _
      $region38: #{tpu_custom_call.1} parent=5 // pred_check_branch
        %195 = sbr.rel (%p192) target = $region40
      $region39: #{tpu_custom_call.1} parent=5 // pred_region
        %s196 = ssub.s32 %s14, 1
        %s197 = smul.u32 2, %s19
        %p198 = scmp.lt.s32.totalorder %s197, 3
        %s199 = scalar_select %p198, %s197, 3
        %s200 = smul.addr %s199, 8
        %s201 = scalar_lea.vmem %s0, %s200
        %p202 = pneg %p40
        %p203 = pneg %p37
        %p204 = pneg %p61
        %p205 = pneg %p58
        %p206 = pneg %p82
        %p207 = pneg %p79
        %p208 = pneg %p103
        %p209 = pneg %p100
        %p210 = pneg %p124
        %p211 = pneg %p121
        %p212 = pneg %p150
        %p213 = pneg %p147
        %s214 = sand.u32 %s137, 1
        %s215 = scalar_lea.sflag [#allocation3], %s214
        %s216 = sand.u32 %s137, 1
        %s217 = smul.addr %s216, 16
        %s218 = scalar_lea.vmem [#allocation2], %s217
        %s219 = smul.u32 2, %s19
        %p220 = scmp.lt.s32.totalorder %s219, 3
        %s221 = scalar_select %p220, %s219, 3
        %s222 = smul.addr %s221, 8
        %s223 = scalar_lea.vmem %s0, %s222
        %s224 = smul.u32 2, %s19
        %s225 = smul.u32 2, %s19
        %v227 = vld [vmem:[%s223] sm:$0xff]
        %v228 = vld [vmem:[%s223 + $0x8] sm:$0xff]
        %v229 = vadd.s32 %v227, 1
        %v230 = vadd.s32 %v228, 1
        %v231 = vlaneseq
        %v232 = vand.u32 %v231, 127
        %v233 = vmul.u32 %v229, 31
        %v234 = vmul.u32 %v230, 31
        %v235 = vand.u32 %v233, 127
        %v236 = vand.u32 %v234, 127
        %237 = vset.pattern.permute.xlu0 0
        %238 = vperm.xlu0 %237, %v235
        %v239 = vpop.permute.xlu0 %238
        %240 = vset.pattern.permute.xlu0 0
        %241 = vperm.xlu0 %240, %v236
        %v242 = vpop.permute.xlu0 %241
        %vm243 = vcmp.eq.s32.totalorder %v232, %v239
        %vm244 = vcmp.eq.s32.totalorder %v232, %v242
        %v245 = vmul.u32 %v229, 43
        %v246 = vmul.u32 %v230, 43
        %v247 = vand.u32 %v245, 127
        %v248 = vand.u32 %v246, 127
        %249 = vset.pattern.permute.xlu0 0
        %250 = vperm.xlu0 %249, %v247
        %v251 = vpop.permute.xlu0 %250
        %252 = vset.pattern.permute.xlu0 0
        %253 = vperm.xlu0 %252, %v248
        %v254 = vpop.permute.xlu0 %253
        %vm255 = vcmp.eq.s32.totalorder %v232, %v251
        %vm256 = vcmp.eq.s32.totalorder %v232, %v254
        %v257 = vmul.u32 %v229, 59
        %v258 = vmul.u32 %v230, 59
        %v259 = vand.u32 %v257, 127
        %v260 = vand.u32 %v258, 127
        %261 = vset.pattern.permute.xlu0 0
        %262 = vperm.xlu0 %261, %v259
        %v263 = vpop.permute.xlu0 %262
        %264 = vset.pattern.permute.xlu0 0
        %265 = vperm.xlu0 %264, %v260
        %v266 = vpop.permute.xlu0 %265
        %vm267 = vcmp.eq.s32.totalorder %v232, %v263
        %vm268 = vcmp.eq.s32.totalorder %v232, %v266
        %v269 = vmul.u32 %v229, 61
        %v270 = vmul.u32 %v230, 61
        %v271 = vand.u32 %v269, 127
        %v272 = vand.u32 %v270, 127
        %273 = vset.pattern.permute.xlu0 0
        %274 = vperm.xlu0 %273, %v271
        %v275 = vpop.permute.xlu0 %274
        %276 = vset.pattern.permute.xlu0 0
        %277 = vperm.xlu0 %276, %v272
        %v278 = vpop.permute.xlu0 %277
        %vm279 = vcmp.eq.s32.totalorder %v232, %v275
        %vm280 = vcmp.eq.s32.totalorder %v232, %v278
        %v281 = vmul.u32 %v229, 73
        %v282 = vmul.u32 %v230, 73
        %v283 = vand.u32 %v281, 127
        %v284 = vand.u32 %v282, 127
        %285 = vset.pattern.permute.xlu0 0
        %286 = vperm.xlu0 %285, %v283
        %v287 = vpop.permute.xlu0 %286
        %288 = vset.pattern.permute.xlu0 0
        %289 = vperm.xlu0 %288, %v284
        %v290 = vpop.permute.xlu0 %289
        %vm291 = vcmp.eq.s32.totalorder %v232, %v287
        %vm292 = vcmp.eq.s32.totalorder %v232, %v290
        %v293 = vmul.u32 %v229, 97
        %v294 = vmul.u32 %v230, 97
        %v295 = vand.u32 %v293, 127
        %v296 = vand.u32 %v294, 127
        %297 = vset.pattern.permute.xlu0 0
        %298 = vperm.xlu0 %297, %v295
        %v299 = vpop.permute.xlu0 %298
        %300 = vset.pattern.permute.xlu0 0
        %301 = vperm.xlu0 %300, %v296
        %v302 = vpop.permute.xlu0 %301
        %vm303 = vcmp.eq.s32.totalorder %v232, %v299
        %vm304 = vcmp.eq.s32.totalorder %v232, %v302
        %v305 = vmul.u32 %v229, 103
        %v306 = vmul.u32 %v230, 103
        %v307 = vand.u32 %v305, 127
        %v308 = vand.u32 %v306, 127
        %309 = vset.pattern.permute.xlu0 0
        %310 = vperm.xlu0 %309, %v307
        %v311 = vpop.permute.xlu0 %310
        %312 = vset.pattern.permute.xlu0 0
        %313 = vperm.xlu0 %312, %v308
        %v314 = vpop.permute.xlu0 %313
        %vm315 = vcmp.eq.s32.totalorder %v232, %v311
        %vm316 = vcmp.eq.s32.totalorder %v232, %v314
        %v317 = vmul.u32 %v229, 113
        %v318 = vmul.u32 %v230, 113
        %v319 = vand.u32 %v317, 127
        %v320 = vand.u32 %v318, 127
        %321 = vset.pattern.permute.xlu0 0
        %322 = vperm.xlu0 %321, %v319
        %v323 = vpop.permute.xlu0 %322
        %324 = vset.pattern.permute.xlu0 0
        %325 = vperm.xlu0 %324, %v320
        %v326 = vpop.permute.xlu0 %325
        %vm327 = vcmp.eq.s32.totalorder %v232, %v323
        %vm328 = vcmp.eq.s32.totalorder %v232, %v326
        %v329 = vsel %vm243, 1, 0
        %v330 = vsel %vm255, 1, 0
        %v331 = vsel %vm267, 1, 0
        %v332 = vsel %vm279, 1, 0
        %v333 = vsel %vm291, 1, 0
        %v334 = vsel %vm303, 1, 0
        %v335 = vsel %vm315, 1, 0
        %v336 = vsel %vm327, 1, 0
        %v337 = vsel %vm244, 1, 0
        %v338 = vsel %vm256, 1, 0
        %v339 = vsel %vm268, 1, 0
        %v340 = vsel %vm280, 1, 0
        %v341 = vsel %vm292, 1, 0
        %v342 = vsel %vm304, 1, 0
        %v343 = vsel %vm316, 1, 0
        %v344 = vsel %vm328, 1, 0
        %v345 = vcvt.s32.f32 %v329
        %v346 = vcvt.s32.f32 %v330
        %v347 = vcvt.s32.f32 %v331
        %v348 = vcvt.s32.f32 %v332
        %v349 = vcvt.s32.f32 %v333
        %v350 = vcvt.s32.f32 %v334
        %v351 = vcvt.s32.f32 %v335
        %v352 = vcvt.s32.f32 %v336
        %v353 = vcvt.s32.f32 %v337
        %v354 = vcvt.s32.f32 %v338
        %v355 = vcvt.s32.f32 %v339
        %v356 = vcvt.s32.f32 %v340
        %v357 = vcvt.s32.f32 %v341
        %v358 = vcvt.s32.f32 %v342
        %v359 = vcvt.s32.f32 %v343
        %v360 = vcvt.s32.f32 %v344
        %v361 = vpack.c.bf16 %v353, %v345
        %v362 = vpack.c.bf16 %v354, %v346
        %v363 = vpack.c.bf16 %v355, %v347
        %v364 = vpack.c.bf16 %v356, %v348
        %v365 = vpack.c.bf16 %v357, %v349
        %v366 = vpack.c.bf16 %v358, %v350
        %v367 = vpack.c.bf16 %v359, %v351
        %v368 = vpack.c.bf16 %v360, %v352
        %v369 = vld [vmem:[%s1] sm:$0xf]
        %v370 = vld [vmem:[%s1 + $0x4] sm:$0xf]
        %v371 = vld [vmem:[%s1 + $0x8] sm:$0xf]
        %v372 = vld [vmem:[%s1 + $0xc] sm:$0xf]
        %v373 = vld [vmem:[%s1 + $0x10] sm:$0xf]
        %v374 = vld [vmem:[%s1 + $0x14] sm:$0xf]
        %v375 = vld [vmem:[%s1 + $0x18] sm:$0xf]
        %v376 = vld [vmem:[%s1 + $0x1c] sm:$0xf]
        %v377 = vld [vmem:[%s1 + $0x20] sm:$0xf]
        %v378 = vld [vmem:[%s1 + $0x24] sm:$0xf]
        %v379 = vld [vmem:[%s1 + $0x28] sm:$0xf]
        %v380 = vld [vmem:[%s1 + $0x2c] sm:$0xf]
        %v381 = vld [vmem:[%s1 + $0x30] sm:$0xf]
        %v382 = vld [vmem:[%s1 + $0x34] sm:$0xf]
        %v383 = vld [vmem:[%s1 + $0x38] sm:$0xf]
        %v384 = vld [vmem:[%s1 + $0x3c] sm:$0xf]
        %v385 = vld [vmem:[%s1 + $0x40] sm:$0xf]
        %v386 = vld [vmem:[%s1 + $0x44] sm:$0xf]
        %v387 = vld [vmem:[%s1 + $0x48] sm:$0xf]
        %v388 = vld [vmem:[%s1 + $0x4c] sm:$0xf]
        %v389 = vld [vmem:[%s1 + $0x50] sm:$0xf]
        %v390 = vld [vmem:[%s1 + $0x54] sm:$0xf]
        %v391 = vld [vmem:[%s1 + $0x58] sm:$0xf]
        %v392 = vld [vmem:[%s1 + $0x5c] sm:$0xf]
        %v393 = vld [vmem:[%s1 + $0x60] sm:$0xf]
        %v394 = vld [vmem:[%s1 + $0x64] sm:$0xf]
        %v395 = vld [vmem:[%s1 + $0x68] sm:$0xf]
        %v396 = vld [vmem:[%s1 + $0x6c] sm:$0xf]
        %v397 = vld [vmem:[%s1 + $0x70] sm:$0xf]
        %v398 = vld [vmem:[%s1 + $0x74] sm:$0xf]
        %v399 = vld [vmem:[%s1 + $0x78] sm:$0xf]
        %v400 = vld [vmem:[%s1 + $0x7c] sm:$0xf]
        %v401 = vld [vmem:[%s1 + $0x80] sm:$0xf]
        %v402 = vld [vmem:[%s1 + $0x84] sm:$0xf]
        %v403 = vld [vmem:[%s1 + $0x88] sm:$0xf]
        %v404 = vld [vmem:[%s1 + $0x8c] sm:$0xf]
        %v405 = vld [vmem:[%s1 + $0x90] sm:$0xf]
        %v406 = vld [vmem:[%s1 + $0x94] sm:$0xf]
        %v407 = vld [vmem:[%s1 + $0x98] sm:$0xf]
        %v408 = vld [vmem:[%s1 + $0x9c] sm:$0xf]
        %v409 = vld [vmem:[%s1 + $0xa0] sm:$0xf]
        %v410 = vld [vmem:[%s1 + $0xa4] sm:$0xf]
        %v411 = vld [vmem:[%s1 + $0xa8] sm:$0xf]
        %v412 = vld [vmem:[%s1 + $0xac] sm:$0xf]
        %v413 = vld [vmem:[%s1 + $0xb0] sm:$0xf]
        %v414 = vld [vmem:[%s1 + $0xb4] sm:$0xf]
        %v415 = vld [vmem:[%s1 + $0xb8] sm:$0xf]
        %v416 = vld [vmem:[%s1 + $0xbc] sm:$0xf]
        %v417 = vld [vmem:[%s1 + $0xc0] sm:$0xf]
        %v418 = vld [vmem:[%s1 + $0xc4] sm:$0xf]
        %v419 = vld [vmem:[%s1 + $0xc8] sm:$0xf]
        %v420 = vld [vmem:[%s1 + $0xcc] sm:$0xf]
        %v421 = vld [vmem:[%s1 + $0xd0] sm:$0xf]
        %v422 = vld [vmem:[%s1 + $0xd4] sm:$0xf]
        %v423 = vld [vmem:[%s1 + $0xd8] sm:$0xf]
        %v424 = vld [vmem:[%s1 + $0xdc] sm:$0xf]
        %v425 = vld [vmem:[%s1 + $0xe0] sm:$0xf]
        %v426 = vld [vmem:[%s1 + $0xe4] sm:$0xf]
        %v427 = vld [vmem:[%s1 + $0xe8] sm:$0xf]
        %v428 = vld [vmem:[%s1 + $0xec] sm:$0xf]
        %v429 = vld [vmem:[%s1 + $0xf0] sm:$0xf]
        %v430 = vld [vmem:[%s1 + $0xf4] sm:$0xf]
        %v431 = vld [vmem:[%s1 + $0xf8] sm:$0xf]
        %v432 = vld [vmem:[%s1 + $0xfc] sm:$0xf]
        %v433 = vld [vmem:[%s1 + $0x100] sm:$0xf]
        %v434 = vld [vmem:[%s1 + $0x104] sm:$0xf]
        %v435 = vld [vmem:[%s1 + $0x108] sm:$0xf]
        %v436 = vld [vmem:[%s1 + $0x10c] sm:$0xf]
        %v437 = vld [vmem:[%s1 + $0x110] sm:$0xf]
        %v438 = vld [vmem:[%s1 + $0x114] sm:$0xf]
        %v439 = vld [vmem:[%s1 + $0x118] sm:$0xf]
        %v440 = vld [vmem:[%s1 + $0x11c] sm:$0xf]
        %v441 = vld [vmem:[%s1 + $0x120] sm:$0xf]
        %v442 = vld [vmem:[%s1 + $0x124] sm:$0xf]
        %v443 = vld [vmem:[%s1 + $0x128] sm:$0xf]
        %v444 = vld [vmem:[%s1 + $0x12c] sm:$0xf]
        %v445 = vld [vmem:[%s1 + $0x130] sm:$0xf]
        %v446 = vld [vmem:[%s1 + $0x134] sm:$0xf]
        %v447 = vld [vmem:[%s1 + $0x138] sm:$0xf]
        %v448 = vld [vmem:[%s1 + $0x13c] sm:$0xf]
        %v449 = vld [vmem:[%s1 + $0x140] sm:$0xf]
        %v450 = vld [vmem:[%s1 + $0x144] sm:$0xf]
        %v451 = vld [vmem:[%s1 + $0x148] sm:$0xf]
        %v452 = vld [vmem:[%s1 + $0x14c] sm:$0xf]
        %v453 = vld [vmem:[%s1 + $0x150] sm:$0xf]
        %v454 = vld [vmem:[%s1 + $0x154] sm:$0xf]
        %v455 = vld [vmem:[%s1 + $0x158] sm:$0xf]
        %v456 = vld [vmem:[%s1 + $0x15c] sm:$0xf]
        %v457 = vld [vmem:[%s1 + $0x160] sm:$0xf]
        %v458 = vld [vmem:[%s1 + $0x164] sm:$0xf]
        %v459 = vld [vmem:[%s1 + $0x168] sm:$0xf]
        %v460 = vld [vmem:[%s1 + $0x16c] sm:$0xf]
        %v461 = vld [vmem:[%s1 + $0x170] sm:$0xf]
        %v462 = vld [vmem:[%s1 + $0x174] sm:$0xf]
        %v463 = vld [vmem:[%s1 + $0x178] sm:$0xf]
        %v464 = vld [vmem:[%s1 + $0x17c] sm:$0xf]
        %v465 = vld [vmem:[%s1 + $0x180] sm:$0xf]
        %v466 = vld [vmem:[%s1 + $0x184] sm:$0xf]
        %v467 = vld [vmem:[%s1 + $0x188] sm:$0xf]
        %v468 = vld [vmem:[%s1 + $0x18c] sm:$0xf]
        %v469 = vld [vmem:[%s1 + $0x190] sm:$0xf]
        %v470 = vld [vmem:[%s1 + $0x194] sm:$0xf]
        %v471 = vld [vmem:[%s1 + $0x198] sm:$0xf]
        %v472 = vld [vmem:[%s1 + $0x19c] sm:$0xf]
        %v473 = vld [vmem:[%s1 + $0x1a0] sm:$0xf]
        %v474 = vld [vmem:[%s1 + $0x1a4] sm:$0xf]
        %v475 = vld [vmem:[%s1 + $0x1a8] sm:$0xf]
        %v476 = vld [vmem:[%s1 + $0x1ac] sm:$0xf]
        %v477 = vld [vmem:[%s1 + $0x1b0] sm:$0xf]
        %v478 = vld [vmem:[%s1 + $0x1b4] sm:$0xf]
        %v479 = vld [vmem:[%s1 + $0x1b8] sm:$0xf]
        %v480 = vld [vmem:[%s1 + $0x1bc] sm:$0xf]
        %v481 = vld [vmem:[%s1 + $0x1c0] sm:$0xf]
        %v482 = vld [vmem:[%s1 + $0x1c4] sm:$0xf]
        %v483 = vld [vmem:[%s1 + $0x1c8] sm:$0xf]
        %v484 = vld [vmem:[%s1 + $0x1cc] sm:$0xf]
        %v485 = vld [vmem:[%s1 + $0x1d0] sm:$0xf]
        %v486 = vld [vmem:[%s1 + $0x1d4] sm:$0xf]
        %v487 = vld [vmem:[%s1 + $0x1d8] sm:$0xf]
        %v488 = vld [vmem:[%s1 + $0x1dc] sm:$0xf]
        %v489 = vld [vmem:[%s1 + $0x1e0] sm:$0xf]
        %v490 = vld [vmem:[%s1 + $0x1e4] sm:$0xf]
        %v491 = vld [vmem:[%s1 + $0x1e8] sm:$0xf]
        %v492 = vld [vmem:[%s1 + $0x1ec] sm:$0xf]
        %v493 = vld [vmem:[%s1 + $0x1f0] sm:$0xf]
        %v494 = vld [vmem:[%s1 + $0x1f4] sm:$0xf]
        %v495 = vld [vmem:[%s1 + $0x1f8] sm:$0xf]
        %v496 = vld [vmem:[%s1 + $0x1fc] sm:$0xf]
        %v497 = vld [vmem:[%s2] sm:$0xff]
        %v498 = vld [vmem:[%s2 + $0x8] sm:$0xff]
        %v627 = vunpack.c.l.b16 %v369
        %v628 = vunpack.c.l.b16 %v370
        %v629 = vunpack.c.l.b16 %v371
        %v630 = vunpack.c.l.b16 %v372
        %v631 = vunpack.c.l.b16 %v373
        %v632 = vunpack.c.l.b16 %v374
        %v633 = vunpack.c.l.b16 %v375
        %v634 = vunpack.c.l.b16 %v376
        %v635 = vunpack.c.l.b16 %v377
        %v636 = vunpack.c.l.b16 %v378
        %v637 = vunpack.c.l.b16 %v379
        %v638 = vunpack.c.l.b16 %v380
        %v639 = vunpack.c.l.b16 %v381
        %v640 = vunpack.c.l.b16 %v382
        %v641 = vunpack.c.l.b16 %v383
        %v642 = vunpack.c.l.b16 %v384
        %v643 = vunpack.c.l.b16 %v385
        %v644 = vunpack.c.l.b16 %v386
        %v645 = vunpack.c.l.b16 %v387
        %v646 = vunpack.c.l.b16 %v388
        %v647 = vunpack.c.l.b16 %v389
        %v648 = vunpack.c.l.b16 %v390
        %v649 = vunpack.c.l.b16 %v391
        %v650 = vunpack.c.l.b16 %v392
        %v651 = vunpack.c.l.b16 %v393
        %v652 = vunpack.c.l.b16 %v394
        %v653 = vunpack.c.l.b16 %v395
        %v654 = vunpack.c.l.b16 %v396
        %v655 = vunpack.c.l.b16 %v397
        %v656 = vunpack.c.l.b16 %v398
        %v657 = vunpack.c.l.b16 %v399
        %v658 = vunpack.c.l.b16 %v400
        %v659 = vunpack.c.l.b16 %v401
        %v660 = vunpack.c.l.b16 %v402
        %v661 = vunpack.c.l.b16 %v403
        %v662 = vunpack.c.l.b16 %v404
        %v663 = vunpack.c.l.b16 %v405
        %v664 = vunpack.c.l.b16 %v406
        %v665 = vunpack.c.l.b16 %v407
        %v666 = vunpack.c.l.b16 %v408
        %v667 = vunpack.c.l.b16 %v409
        %v668 = vunpack.c.l.b16 %v410
        %v669 = vunpack.c.l.b16 %v411
        %v670 = vunpack.c.l.b16 %v412
        %v671 = vunpack.c.l.b16 %v413
        %v672 = vunpack.c.l.b16 %v414
        %v673 = vunpack.c.l.b16 %v415
        %v674 = vunpack.c.l.b16 %v416
        %v675 = vunpack.c.l.b16 %v417
        %v676 = vunpack.c.l.b16 %v418
        %v677 = vunpack.c.l.b16 %v419
        %v678 = vunpack.c.l.b16 %v420
        %v679 = vunpack.c.l.b16 %v421
        %v680 = vunpack.c.l.b16 %v422
        %v681 = vunpack.c.l.b16 %v423
        %v682 = vunpack.c.l.b16 %v424
        %v683 = vunpack.c.l.b16 %v425
        %v684 = vunpack.c.l.b16 %v426
        %v685 = vunpack.c.l.b16 %v427
        %v686 = vunpack.c.l.b16 %v428
        %v687 = vunpack.c.l.b16 %v429
        %v688 = vunpack.c.l.b16 %v430
        %v689 = vunpack.c.l.b16 %v431
        %v690 = vunpack.c.l.b16 %v432
        %v691 = vunpack.c.l.b16 %v433
        %v692 = vunpack.c.l.b16 %v434
        %v693 = vunpack.c.l.b16 %v435
        %v694 = vunpack.c.l.b16 %v436
        %v695 = vunpack.c.l.b16 %v437
        %v696 = vunpack.c.l.b16 %v438
        %v697 = vunpack.c.l.b16 %v439
        %v698 = vunpack.c.l.b16 %v440
        %v699 = vunpack.c.l.b16 %v441
        %v700 = vunpack.c.l.b16 %v442
        %v701 = vunpack.c.l.b16 %v443
        %v702 = vunpack.c.l.b16 %v444
        %v703 = vunpack.c.l.b16 %v445
        %v704 = vunpack.c.l.b16 %v446
        %v705 = vunpack.c.l.b16 %v447
        %v706 = vunpack.c.l.b16 %v448
        %v707 = vunpack.c.l.b16 %v449
        %v708 = vunpack.c.l.b16 %v450
        %v709 = vunpack.c.l.b16 %v451
        %v710 = vunpack.c.l.b16 %v452
        %v711 = vunpack.c.l.b16 %v453
        %v712 = vunpack.c.l.b16 %v454
        %v713 = vunpack.c.l.b16 %v455
        %v714 = vunpack.c.l.b16 %v456
        %v715 = vunpack.c.l.b16 %v457
        %v716 = vunpack.c.l.b16 %v458
        %v717 = vunpack.c.l.b16 %v459
        %v718 = vunpack.c.l.b16 %v460
        %v719 = vunpack.c.l.b16 %v461
        %v720 = vunpack.c.l.b16 %v462
        %v721 = vunpack.c.l.b16 %v463
        %v722 = vunpack.c.l.b16 %v464
        %v723 = vunpack.c.l.b16 %v465
        %v724 = vunpack.c.l.b16 %v466
        %v725 = vunpack.c.l.b16 %v467
        %v726 = vunpack.c.l.b16 %v468
        %v727 = vunpack.c.l.b16 %v469
        %v728 = vunpack.c.l.b16 %v470
        %v729 = vunpack.c.l.b16 %v471
        %v730 = vunpack.c.l.b16 %v472
        %v731 = vunpack.c.l.b16 %v473
        %v732 = vunpack.c.l.b16 %v474
        %v733 = vunpack.c.l.b16 %v475
        %v734 = vunpack.c.l.b16 %v476
        %v735 = vunpack.c.l.b16 %v477
        %v736 = vunpack.c.l.b16 %v478
        %v737 = vunpack.c.l.b16 %v479
        %v738 = vunpack.c.l.b16 %v480
        %v739 = vunpack.c.l.b16 %v481
        %v740 = vunpack.c.l.b16 %v482
        %v741 = vunpack.c.l.b16 %v483
        %v742 = vunpack.c.l.b16 %v484
        %v743 = vunpack.c.l.b16 %v485
        %v744 = vunpack.c.l.b16 %v486
        %v745 = vunpack.c.l.b16 %v487
        %v746 = vunpack.c.l.b16 %v488
        %v747 = vunpack.c.l.b16 %v489
        %v748 = vunpack.c.l.b16 %v490
        %v749 = vunpack.c.l.b16 %v491
        %v750 = vunpack.c.l.b16 %v492
        %v751 = vunpack.c.l.b16 %v493
        %v752 = vunpack.c.l.b16 %v494
        %v753 = vunpack.c.l.b16 %v495
        %v754 = vunpack.c.l.b16 %v496
        %v755 = vpack.c.b16 %v628, %v627
        %v756 = vpack.c.b16 %v630, %v629
        %v757 = vpack.c.b16 %v632, %v631
        %v758 = vpack.c.b16 %v634, %v633
        %v759 = vpack.c.b16 %v636, %v635
        %v760 = vpack.c.b16 %v638, %v637
        %v761 = vpack.c.b16 %v640, %v639
        %v762 = vpack.c.b16 %v642, %v641
        %v763 = vpack.c.b16 %v644, %v643
        %v764 = vpack.c.b16 %v646, %v645
        %v765 = vpack.c.b16 %v648, %v647
        %v766 = vpack.c.b16 %v650, %v649
        %v767 = vpack.c.b16 %v652, %v651
        %v768 = vpack.c.b16 %v654, %v653
        %v769 = vpack.c.b16 %v656, %v655
        %v770 = vpack.c.b16 %v658, %v657
        %v771 = vpack.c.b16 %v660, %v659
        %v772 = vpack.c.b16 %v662, %v661
        %v773 = vpack.c.b16 %v664, %v663
        %v774 = vpack.c.b16 %v666, %v665
        %v775 = vpack.c.b16 %v668, %v667
        %v776 = vpack.c.b16 %v670, %v669
        %v777 = vpack.c.b16 %v672, %v671
        %v778 = vpack.c.b16 %v674, %v673
        %v779 = vpack.c.b16 %v676, %v675
        %v780 = vpack.c.b16 %v678, %v677
        %v781 = vpack.c.b16 %v680, %v679
        %v782 = vpack.c.b16 %v682, %v681
        %v783 = vpack.c.b16 %v684, %v683
        %v784 = vpack.c.b16 %v686, %v685
        %v785 = vpack.c.b16 %v688, %v687
        %v786 = vpack.c.b16 %v690, %v689
        %v787 = vpack.c.b16 %v692, %v691
        %v788 = vpack.c.b16 %v694, %v693
        %v789 = vpack.c.b16 %v696, %v695
        %v790 = vpack.c.b16 %v698, %v697
        %v791 = vpack.c.b16 %v700, %v699
        %v792 = vpack.c.b16 %v702, %v701
        %v793 = vpack.c.b16 %v704, %v703
        %v794 = vpack.c.b16 %v706, %v705
        %v795 = vpack.c.b16 %v708, %v707
        %v796 = vpack.c.b16 %v710, %v709
        %v797 = vpack.c.b16 %v712, %v711
        %v798 = vpack.c.b16 %v714, %v713
        %v799 = vpack.c.b16 %v716, %v715
        %v800 = vpack.c.b16 %v718, %v717
        %v801 = vpack.c.b16 %v720, %v719
        %v802 = vpack.c.b16 %v722, %v721
        %v803 = vpack.c.b16 %v724, %v723
        %v804 = vpack.c.b16 %v726, %v725
        %v805 = vpack.c.b16 %v728, %v727
        %v806 = vpack.c.b16 %v730, %v729
        %v807 = vpack.c.b16 %v732, %v731
        %v808 = vpack.c.b16 %v734, %v733
        %v809 = vpack.c.b16 %v736, %v735
        %v810 = vpack.c.b16 %v738, %v737
        %v811 = vpack.c.b16 %v740, %v739
        %v812 = vpack.c.b16 %v742, %v741
        %v813 = vpack.c.b16 %v744, %v743
        %v814 = vpack.c.b16 %v746, %v745
        %v815 = vpack.c.b16 %v748, %v747
        %v816 = vpack.c.b16 %v750, %v749
        %v817 = vpack.c.b16 %v752, %v751
        %v818 = vpack.c.b16 %v754, %v753
        %883 = vmatprep.subr.bf16.mxu0 0
        %884 = vmatpush1.bf16.msra.mxu0 %v755
        %885 = vmatprep.subr.bf16.mxu0 0
        %886 = vmatpush1.bf16.msra.mxu0 %v756
        %887 = vmatprep.subr.bf16.mxu0 0
        %888 = vmatpush1.bf16.msra.mxu0 %v757
        %889 = vmatprep.subr.bf16.mxu0 0
        %890 = vmatpush1.bf16.msra.mxu0 %v758
        %891 = vmatprep.subr.bf16.mxu0 0
        %892 = vmatpush1.bf16.msra.mxu0 %v759
        %893 = vmatprep.subr.bf16.mxu0 0
        %894 = vmatpush1.bf16.msra.mxu0 %v760
        %895 = vmatprep.subr.bf16.mxu0 0
        %896 = vmatpush1.bf16.msra.mxu0 %v761
        %897 = vmatprep.subr.bf16.mxu0 0
        %898 = vmatpush1.bf16.msra.mxu0 %v762
        %899 = vmatprep.subr.bf16.mxu0 0
        %900 = vmatpush1.bf16.msra.mxu0 %v763
        %901 = vmatprep.subr.bf16.mxu0 0
        %902 = vmatpush1.bf16.msra.mxu0 %v764
        %903 = vmatprep.subr.bf16.mxu0 0
        %904 = vmatpush1.bf16.msra.mxu0 %v765
        %905 = vmatprep.subr.bf16.mxu0 0
        %906 = vmatpush1.bf16.msra.mxu0 %v766
        %907 = vmatprep.subr.bf16.mxu0 0
        %908 = vmatpush1.bf16.msra.mxu0 %v767
        %909 = vmatprep.subr.bf16.mxu0 0
        %910 = vmatpush1.bf16.msra.mxu0 %v768
        %911 = vmatprep.subr.bf16.mxu0 0
        %912 = vmatpush1.bf16.msra.mxu0 %v769
        %913 = vmatprep.subr.bf16.mxu0 0
        %914 = vmatpush1.bf16.msra.mxu0 %v770
        %915 = vmatprep.mubr.bf16.mxu0 %v362
        %916 = vmatmul.mubr.bf16.gmra.mrb[0].mxu0 %v361
        %v917 = vpop.f32.mrb[0].mxu0
        %v918 = vadd.f32 %v497, %v917
        %v919 = vpop.f32.mrb[0].mxu0
        %v920 = vpop.f32.mrb[0].mxu0
        %v921 = vadd.f32 %v498, %v920
        %v922 = vpop.f32.mrb[0].mxu0
        %923 = vdwg.mxu0
        %924 = vmatprep.subr.bf16.mxu0 0
        %925 = vmatpush1.bf16.msra.mxu0 %v771
        %926 = vmatprep.subr.bf16.mxu0 0
        %927 = vmatpush1.bf16.msra.mxu0 %v772
        %928 = vmatprep.subr.bf16.mxu0 0
        %929 = vmatpush1.bf16.msra.mxu0 %v773
        %930 = vmatprep.subr.bf16.mxu0 0
        %931 = vmatpush1.bf16.msra.mxu0 %v774
        %932 = vmatprep.subr.bf16.mxu0 0
        %933 = vmatpush1.bf16.msra.mxu0 %v775
        %934 = vmatprep.subr.bf16.mxu0 0
        %935 = vmatpush1.bf16.msra.mxu0 %v776
        %936 = vmatprep.subr.bf16.mxu0 0
        %937 = vmatpush1.bf16.msra.mxu0 %v777
        %938 = vmatprep.subr.bf16.mxu0 0
        %939 = vmatpush1.bf16.msra.mxu0 %v778
        %940 = vmatprep.subr.bf16.mxu0 0
        %941 = vmatpush1.bf16.msra.mxu0 %v779
        %942 = vmatprep.subr.bf16.mxu0 0
        %943 = vmatpush1.bf16.msra.mxu0 %v780
        %944 = vmatprep.subr.bf16.mxu0 0
        %945 = vmatpush1.bf16.msra.mxu0 %v781
        %946 = vmatprep.subr.bf16.mxu0 0
        %947 = vmatpush1.bf16.msra.mxu0 %v782
        %948 = vmatprep.subr.bf16.mxu0 0
        %949 = vmatpush1.bf16.msra.mxu0 %v783
        %950 = vmatprep.subr.bf16.mxu0 0
        %951 = vmatpush1.bf16.msra.mxu0 %v784
        %952 = vmatprep.subr.bf16.mxu0 0
        %953 = vmatpush1.bf16.msra.mxu0 %v785
        %954 = vmatprep.subr.bf16.mxu0 0
        %955 = vmatpush1.bf16.msra.mxu0 %v786
        %956 = vmatprep.mubr.bf16.mxu0 %v364
        %957 = vmatmul.mubr.bf16.gmra.mrb[0].mxu0 %v363
        %v958 = vpop.f32.mrb[0].mxu0
        %v959 = vadd.f32 %v918, %v958
        %v960 = vpop.f32.mrb[0].mxu0
        %v961 = vpop.f32.mrb[0].mxu0
        %v962 = vadd.f32 %v921, %v961
        %v963 = vpop.f32.mrb[0].mxu0
        %964 = vdwg.mxu0
        %965 = vmatprep.subr.bf16.mxu0 0
        %966 = vmatpush1.bf16.msra.mxu0 %v787
        %967 = vmatprep.subr.bf16.mxu0 0
        %968 = vmatpush1.bf16.msra.mxu0 %v788
        %969 = vmatprep.subr.bf16.mxu0 0
        %970 = vmatpush1.bf16.msra.mxu0 %v789
        %971 = vmatprep.subr.bf16.mxu0 0
        %972 = vmatpush1.bf16.msra.mxu0 %v790
        %973 = vmatprep.subr.bf16.mxu0 0
        %974 = vmatpush1.bf16.msra.mxu0 %v791
        %975 = vmatprep.subr.bf16.mxu0 0
        %976 = vmatpush1.bf16.msra.mxu0 %v792
        %977 = vmatprep.subr.bf16.mxu0 0
        %978 = vmatpush1.bf16.msra.mxu0 %v793
        %979 = vmatprep.subr.bf16.mxu0 0
        %980 = vmatpush1.bf16.msra.mxu0 %v794
        %981 = vmatprep.subr.bf16.mxu0 0
        %982 = vmatpush1.bf16.msra.mxu0 %v795
        %983 = vmatprep.subr.bf16.mxu0 0
        %984 = vmatpush1.bf16.msra.mxu0 %v796
        %985 = vmatprep.subr.bf16.mxu0 0
        %986 = vmatpush1.bf16.msra.mxu0 %v797
        %987 = vmatprep.subr.bf16.mxu0 0
        %988 = vmatpush1.bf16.msra.mxu0 %v798
        %989 = vmatprep.subr.bf16.mxu0 0
        %990 = vmatpush1.bf16.msra.mxu0 %v799
        %991 = vmatprep.subr.bf16.mxu0 0
        %992 = vmatpush1.bf16.msra.mxu0 %v800
        %993 = vmatprep.subr.bf16.mxu0 0
        %994 = vmatpush1.bf16.msra.mxu0 %v801
        %995 = vmatprep.subr.bf16.mxu0 0
        %996 = vmatpush1.bf16.msra.mxu0 %v802
        %997 = vmatprep.mubr.bf16.mxu0 %v366
        %998 = vmatmul.mubr.bf16.gmra.mrb[0].mxu0 %v365
        %v999 = vpop.f32.mrb[0].mxu0
        %v1000 = vadd.f32 %v959, %v999
        %v1001 = vpop.f32.mrb[0].mxu0
        %v1002 = vpop.f32.mrb[0].mxu0
        %v1003 = vadd.f32 %v962, %v1002
        %v1004 = vpop.f32.mrb[0].mxu0
        %1005 = vdwg.mxu0
        %1006 = vmatprep.subr.bf16.mxu0 0
        %1007 = vmatpush1.bf16.msra.mxu0 %v803
        %1008 = vmatprep.subr.bf16.mxu0 0
        %1009 = vmatpush1.bf16.msra.mxu0 %v804
        %1010 = vmatprep.subr.bf16.mxu0 0
        %1011 = vmatpush1.bf16.msra.mxu0 %v805
        %1012 = vmatprep.subr.bf16.mxu0 0
        %1013 = vmatpush1.bf16.msra.mxu0 %v806
        %1014 = vmatprep.subr.bf16.mxu0 0
        %1015 = vmatpush1.bf16.msra.mxu0 %v807
        %1016 = vmatprep.subr.bf16.mxu0 0
        %1017 = vmatpush1.bf16.msra.mxu0 %v808
        %1018 = vmatprep.subr.bf16.mxu0 0
        %1019 = vmatpush1.bf16.msra.mxu0 %v809
        %1020 = vmatprep.subr.bf16.mxu0 0
        %1021 = vmatpush1.bf16.msra.mxu0 %v810
        %1022 = vmatprep.subr.bf16.mxu0 0
        %1023 = vmatpush1.bf16.msra.mxu0 %v811
        %1024 = vmatprep.subr.bf16.mxu0 0
        %1025 = vmatpush1.bf16.msra.mxu0 %v812
        %1026 = vmatprep.subr.bf16.mxu0 0
        %1027 = vmatpush1.bf16.msra.mxu0 %v813
        %1028 = vmatprep.subr.bf16.mxu0 0
        %1029 = vmatpush1.bf16.msra.mxu0 %v814
        %1030 = vmatprep.subr.bf16.mxu0 0
        %1031 = vmatpush1.bf16.msra.mxu0 %v815
        %1032 = vmatprep.subr.bf16.mxu0 0
        %1033 = vmatpush1.bf16.msra.mxu0 %v816
        %1034 = vmatprep.subr.bf16.mxu0 0
        %1035 = vmatpush1.bf16.msra.mxu0 %v817
        %1036 = vmatprep.subr.bf16.mxu0 0
        %1037 = vmatpush1.bf16.msra.mxu0 %v818
        %1038 = vmatprep.mubr.bf16.mxu0 %v368
        %1039 = vmatmul.mubr.bf16.gmra.mrb[0].mxu0 %v367
        %v1040 = vpop.f32.mrb[0].mxu0
        %v1041 = vadd.f32 %v1000, %v1040
        %v1042 = vpop.f32.mrb[0].mxu0
        %v1043 = vpop.f32.mrb[0].mxu0
        %v1044 = vadd.f32 %v1003, %v1043
        %v1045 = vpop.f32.mrb[0].mxu0
        %1046 = vdwg.mxu0
        %vm1047 = vcmask 523264
        %v1048 = vsel %vm1047, %v1041, 0.0
        %1049 = vadd.xlane.f32.xlu0 %v1048
        %v1050 = vpop.xlane.xlu0 %1049
        %v1051 = vsel %vm1047, %v1044, 0.0
        %1052 = vadd.xlane.f32.xlu0 %v1051
        %v1053 = vpop.xlane.xlu0 %1052
        %v1054 = vrcp.pop 64.0
        %v1055 = vmul.f32 %v1050, %v1054
        %v1056 = vmul.f32 %v1053, %v1054
        %v1057 = vsub.f32 %v1041, %v1055
        %v1058 = vsub.f32 %v1044, %v1056
        %v1059 = vmul.f32 %v1057, %v1057
        %v1060 = vmul.f32 %v1058, %v1058
        %v1061 = vsel %vm1047, %v1059, 0.0
        %1062 = vadd.xlane.f32.xlu0 %v1061
        %v1063 = vpop.xlane.xlu0 %1062
        %v1064 = vsel %vm1047, %v1060, 0.0
        %1065 = vadd.xlane.f32.xlu0 %v1064
        %v1066 = vpop.xlane.xlu0 %1065
        %v1067 = vmul.f32 %v1063, %v1054
        %v1068 = vmul.f32 %v1066, %v1054
        %v1069 = vadd.f32 %v1067, 1e-12
        %v1070 = vadd.f32 %v1068, 1e-12
        %v1071 = vrsqrt.pop %v1069
        %v1072 = vrsqrt.pop %v1070
        %v1073 = vmul.f32 %v1057, %v1071
        %v1074 = vmul.f32 %v1058, %v1072
        %v1075 = vld [vmem:[%s3] sm:$0x1]
        %v1077 = vlaneseq
        %v1078 = vshrl.u32 %v1077, 7
        %v1079 = vsub.s32 0, %v1078
        %v1080 = vrot.slane %v1075, %v1079
        %v1082 = vmul.f32 %v1073, %v1080
        %v1083 = vmul.f32 %v1074, %v1080
        %v1084 = vld [vmem:[%s4] sm:$0x1]
        %v1086 = vlaneseq
        %v1087 = vshrl.u32 %v1086, 7
        %v1088 = vsub.s32 0, %v1087
        %v1089 = vrot.slane %v1084, %v1088
        %v1091 = vadd.f32 %v1082, %v1089
        %v1092 = vadd.f32 %v1083, %v1089
        %1093 = vst.msk [vmem:[%s218] sm:$0xff] %vm1047, %v1091
        %1094 = vst.msk [vmem:[%s218 + $0x8] sm:$0xff] %vm1047, %v1092
        %s1095 = sand.u32 %s137, 1
        %s1096 = scalar_lea.sflag [#allocation3], %s1095
        %s1097 = sand.u32 %s137, 1
        %s1098 = smul.addr %s1097, 16
        %s1099 = scalar_lea.vmem [#allocation2], %s1098
        // Predicated region
        $region41: #{tpu_custom_call.1} parent=39 // pred_check
          %p1100 = pneg %p147
        $region42: #{tpu_custom_call.1} parent=39 // pred_check_branch
          %1102 = sbr.rel (%p1100) target = $region44
        $region43: #{tpu_custom_call.1} parent=39 // pred_region
          %s1103 = smul.u32 2, %s19
          %s1105 = ssub.s32 256, 256
          %1106 = vsyncadd %s1096, %s1105
          %s1107 = smul.addr %s1103, 128
          %s1108 = scalar_lea.hbm %s5, %s1107
          %s1109 = sshll.u32 %s1099, 4
          %s1110 = int_to_ptr.vmem [resolvable:$true] %s1109
          %1115 = dma.vmem_to_hbm [thread:$0]  %s1110, 256, %s1108, %s1096, 128, 128, 8
        $region44: #{tpu_custom_call.1} parent=39 // pred_fallthru
          _
      $region40: #{tpu_custom_call.1} parent=5 // pred_fallthru
        _
      %p1116 = scmp.le.s32.totalorder 2, %s14
      // Predicated region
      $region45: #{tpu_custom_call.1} parent=5 // pred_check
        %p1117 = pneg %p1116
      $region46: #{tpu_custom_call.1} parent=5 // pred_check_branch
        %1119 = sbr.rel (%p1117) target = $region48
      $region47: #{tpu_custom_call.1} parent=5 // pred_region
        %s1120 = ssub.s32 %s14, 2
        // Predicated region
        $region49: #{tpu_custom_call.1} parent=47 // pred_check
          %p1121 = pneg %p153
        $region50: #{tpu_custom_call.1} parent=47 // pred_check_branch
          %1123 = sbr.rel (%p1121) target = $region52
        $region51: #{tpu_custom_call.1} parent=47 // pred_region
          %s1124 = sand.u32 %s138, 1
          %s1125 = scalar_lea.sflag [#allocation3], %s1124
          %s1126 = sand.u32 %s138, 1
          %s1127 = smul.addr %s1126, 16
          %s1128 = scalar_lea.vmem [#allocation2], %s1127
          %1129 = dma.done %s1125, 256
        $region52: #{tpu_custom_call.1} parent=47 // pred_fallthru
          _
      $region48: #{tpu_custom_call.1} parent=5 // pred_fallthru
        _
    $region6: #{tpu_custom_call.1} parent=1 // loop_footer
      %s18 = sadd.s32 1, %s14
    $region7: #{tpu_custom_call.1} parent=1 // loop_footer_branch
      %13 = sbr.rel target = $region3
    $region8: #{tpu_custom_call.1} parent=1 // loop_exit
      _
    %1130 = vsyncpa [#allocation3], 1
    %s1131 = scalar_lea.sflag [#allocation3], 1
    %1132 = vsyncpa %s1131, 1

</llo_original>
